<compile_context>
chip_gen: v5e
topology: v5e:2x2
jax: 0.10.0
libtpu: 0.0.40
codegen_flags: <defaults>
</compile_context>

<pallas_src>
import jax
import jax.numpy as jnp
from jax.experimental import pallas as pl
from jax.experimental.pallas import tpu as pltpu


# ----------------------------- kernel ---------------------------------------


def _linear_kernel(x_ref, w_ref, b_ref, o_ref):
    # x_ref: (tm, tk), w_ref: (tk, tn) [already W^T], b_ref: (1, tn),
    # o_ref: (tm, tn) f32 -- used directly as the accumulator (resident across K).
    @pl.when(pl.program_id(2) == 0)
    def _():
        o_ref[...] = jnp.broadcast_to(b_ref[...], o_ref.shape)

    o_ref[...] += jnp.dot(
        x_ref[...], w_ref[...], preferred_element_type=jnp.float32
    )


# --------------------------- tiling helpers ---------------------------------


def _round_up(x, m):
    return ((x + m - 1) // m) * m


def _largest_divisor_multiple(n, limit, quantum):
    """Largest d <= limit with d % quantum == 0 and n % d == 0 (n % quantum == 0)."""
    best = quantum
    d = quantum
    while d <= limit:
        if n % d == 0:
            best = d
        d += quantum
    return best


def _choose_tile_and_pad(dim, target, quantum):
    """Return (tile, padded_dim) with minimal padding and tile <= target."""
    padded = _round_up(dim, quantum)
    if padded <= target:
        return padded, padded
    tile = _largest_divisor_multiple(padded, target, quantum)
    if tile * 4 >= target:
        return tile, padded
    # Awkward factorization (e.g. quantum * large prime): pad up to the target
    # tile instead of running many tiny grid steps.
    return target, _round_up(dim, target)


def _device_kind():
    try:
        return jax.devices()[0].device_kind.lower()
    except Exception:
        return ""


def _tile_targets(kind):
    """(target_tm, target_tn, target_tk, vmem_limit_bytes) per generation."""
    if "v6" in kind:
        # 128 MiB physical VMEM: 1024-tiles (~16 MiB double-buffered) cross
        # into MXU-bound territory; raise the scoped limit for headroom.
        return 1024, 1024, 512, 64 * 1024 * 1024
    # v5e (16 MiB default scoped VMEM) and v7x (64 MiB/TC): 512-tiles.
    return 512, 512, 512, None


def _maybe_split_for_megacore(tm, Mp, tn, Np, kind):
    """On v7x, make sure the parallel grid has >= 2 blocks so both TCs work."""
    if "v7" not in kind:
        return tm, tn
    if (Mp // tm) * (Np // tn) >= 2:
        return tm, tn
    if Mp >= 16:
        half = _largest_divisor_multiple(Mp, max(Mp // 2, 8), 8)
        if Mp // half >= 2:
            return half, tn
    if Np >= 256:
        half = _largest_divisor_multiple(Np, max(Np // 2, 128), 128)
        if Np // half >= 2:
            return tm, half
    return tm, tn


# ------------------------------ wrappers ------------------------------------


def prepare_linear_params(weight, bias, *, kind=None):
    """One-time parameter prep: transpose + lane-dense pad of W to (Kp, Np).

    weight: (N, K) float32, bias: (N,) float32 (torch.nn.Linear layout).
    Do this once (outside the hot path) so the per-call kernel does not pay an
    extra HBM read+write of W for the transpose/pad.
    """
    if kind is None:
        kind = _device_kind()
    target_tm, target_tn, target_tk, vmem_limit = _tile_targets(kind)

    N, K = weight.shape
    tn, Np = _choose_tile_and_pad(N, target_tn, 128)
    tk, Kp = _choose_tile_and_pad(K, target_tk, 128)

    wT_p = jnp.pad(weight.astype(jnp.float32).T, ((0, Kp - K), (0, Np - N)))
    b_p = jnp.pad(bias.astype(jnp.float32), (0, Np - N)).reshape(1, Np)

    meta = dict(N=N, K=K, tn=tn, tk=tk, Np=Np, Kp=Kp,
                target_tm=target_tm, vmem_limit=vmem_limit, kind=kind)
    return wT_p, b_p, meta


def linear_pallas(x, wT_p, b_p, meta):
    """y = x @ W^T + b with pre-prepared (padded, transposed) weight/bias."""
    N, K = meta["N"], meta["K"]
    tn, tk = meta["tn"], meta["tk"]
    Np, Kp = meta["Np"], meta["Kp"]

    orig_shape = x.shape
    assert orig_shape[-1] == K, "last dim of x must equal input_size"
    x2d = x.astype(jnp.float32).reshape(-1, K)
    M = x2d.shape[0]

    tm, Mp = _choose_tile_and_pad(M, meta["target_tm"], 8)
    tm, tn = _maybe_split_for_megacore(tm, Mp, tn, Np, meta["kind"])

    x_p = jnp.pad(x2d, ((0, Mp - M), (0, Kp - K)))

    grid = (Mp // tm, Np // tn, Kp // tk)

    cp_kwargs = dict(dimension_semantics=("parallel", "parallel", "arbitrary"))
    if meta["vmem_limit"] is not None:
        cp_kwargs["vmem_limit_bytes"] = meta["vmem_limit"]

    cost = pl.CostEstimate(
        flops=2 * M * N * K,
        transcendentals=0,
        bytes_accessed=(M * K + K * N + M * N) * 4,
    )

    out = pl.pallas_call(
        _linear_kernel,
        out_shape=jax.ShapeDtypeStruct((Mp, Np), jnp.float32),
        grid=grid,
        in_specs=[
            pl.BlockSpec((tm, tk), lambda i, j, k: (i, k)),   # x tile
            pl.BlockSpec((tk, tn), lambda i, j, k: (k, j)),   # W^T tile
            pl.BlockSpec((1, tn), lambda i, j, k: (0, j)),    # bias slice
        ],
        out_specs=pl.BlockSpec((tm, tn), lambda i, j, k: (i, j)),
        compiler_params=pltpu.CompilerParams(**cp_kwargs),
        cost_estimate=cost,
    )(x_p, wT_p, b_p)

    return out[:M, :N].reshape(*orig_shape[:-1], N).astype(x.dtype)


# ------------------------------- test ---------------------------------------


if __name__ == "__main__":
    # Small shapes consistent with the module: batch=2, seq=8, hidden(input_size)=32.
    # TODO(synk): at these toy sizes a Pallas kernel is pure overhead vs. XLA's
    # fused einsum; the per-generation tiling only pays off at production sizes.
    batch, seq, hidden = 2, 8, 32

    key = jax.random.PRNGKey(0)
    kx, kw, kb = jax.random.split(key, 3)

    # Deterministic parameters, torch.nn.Linear(hidden, hidden) shapes/init range.
    bound = 1.0 / (hidden ** 0.5)
    weight = jax.random.uniform(kw, (hidden, hidden), jnp.float32, -bound, bound)
    bias = jax.random.uniform(kb, (hidden,), jnp.float32, -bound, bound)

    x = jax.random.normal(kx, (batch, seq, hidden), jnp.float32)

    # One-time parameter prep (hoisted weight transpose/pad), then the kernel call.
    wT_p, b_p, meta = prepare_linear_params(weight, bias)
    y = linear_pallas(x, wT_p, b_p, meta)
    jax.block_until_ready(y)

    # Correctness check against plain JAX reference of torch Linear semantics.
    y_ref = jnp.einsum("bsk,nk->bsn", x, weight) + bias
    assert y.shape == (batch, seq, hidden)
    assert jnp.allclose(y, y_ref, atol=1e-5, rtol=1e-5)

    print("KERNEL_OK")
</pallas_src>

<mosaic_0001>
module attributes {stable_mosaic.version = 11 : i64} {
  func.func @_linear_kernel(%arg0: i32, %arg1: i32, %arg2: i32, %arg3: memref<16x128xf32, #tpu.memory_space<vmem>>, %arg4: memref<128x128xf32, #tpu.memory_space<vmem>>, %arg5: memref<1x128xf32, #tpu.memory_space<vmem>>, %arg6: memref<16x128xf32, #tpu.memory_space<vmem>>) attributes {dimension_semantics = [#tpu.dimension_semantics<parallel>, #tpu.dimension_semantics<parallel>, #tpu.dimension_semantics<arbitrary>], iteration_bounds = array<i64: 1, 1, 1>, scalar_prefetch = 0 : i64, scratch_operands = 0 : i64, tpu.core_type = #tpu.core_type<tc>, window_params = [{transform_indices = @transform_0, window_bounds = array<i64: 16, 128>}, {transform_indices = @transform_1, window_bounds = array<i64: 128, 128>}, {transform_indices = @transform_2, window_bounds = array<i64: 1, 128>}, {transform_indices = @transform_3, window_bounds = array<i64: 16, 128>}]} {
    %c0_i32 = arith.constant 0 : i32
    %0 = arith.cmpi eq, %arg2, %c0_i32 : i32
    %1 = arith.extui %0 : i1 to i32
    %c0_i32_0 = arith.constant 0 : i32
    %2 = arith.cmpi ne, %1, %c0_i32_0 : i32
    scf.if %2 {
      %c0_8 = arith.constant 0 : index
      %c0_9 = arith.constant 0 : index
      %9 = vector.load %arg5[%c0_8, %c0_9] : memref<1x128xf32, #tpu.memory_space<vmem>>, vector<1x128xf32>
      %10 = vector.shape_cast %9 : vector<1x128xf32> to vector<1x128xf32>
      %11 = vector.broadcast %10 : vector<1x128xf32> to vector<16x128xf32>
      %c0_10 = arith.constant 0 : index
      %c0_11 = arith.constant 0 : index
      %12 = vector.load %arg6[%c0_10, %c0_11] : memref<16x128xf32, #tpu.memory_space<vmem>>, vector<16x128xf32>
      tpu.vector_store %arg6[%c0_10, %c0_11], %11 {strides = array<i32>} : memref<16x128xf32, #tpu.memory_space<vmem>>, vector<16x128xf32>,
    } else {
    }
    %c0 = arith.constant 0 : index
    %c0_1 = arith.constant 0 : index
    %3 = vector.load %arg6[%c0, %c0_1] : memref<16x128xf32, #tpu.memory_space<vmem>>, vector<16x128xf32>
    %c0_2 = arith.constant 0 : index
    %c0_3 = arith.constant 0 : index
    %4 = vector.load %arg3[%c0_2, %c0_3] : memref<16x128xf32, #tpu.memory_space<vmem>>, vector<16x128xf32>
    %c0_4 = arith.constant 0 : index
    %c0_5 = arith.constant 0 : index
    %5 = vector.load %arg4[%c0_4, %c0_5] : memref<128x128xf32, #tpu.memory_space<vmem>>, vector<128x128xf32>
    %cst = arith.constant dense<0.000000e+00> : vector<16x128xf32>
    %6 = tpu.matmul %4, %5, %cst {dimension_numbers = #tpu.dot_dimension_numbers<[1], [0], [0], [1], [0, 0, 1, 1], [], []>} : vector<16x128xf32>, vector<128x128xf32>, vector<16x128xf32> -> vector<16x128xf32>
    %7 = arith.addf %3, %6 : vector<16x128xf32>
    %c0_6 = arith.constant 0 : index
    %c0_7 = arith.constant 0 : index
    %8 = vector.load %arg6[%c0_6, %c0_7] : memref<16x128xf32, #tpu.memory_space<vmem>>, vector<16x128xf32>
    tpu.vector_store %arg6[%c0_6, %c0_7], %7 {strides = array<i32>} : memref<16x128xf32, #tpu.memory_space<vmem>>, vector<16x128xf32>,
    return
  }
  func.func @transform_0(%arg0: i32, %arg1: i32, %arg2: i32) -> (i32, i32) {
    %c0_i32 = arith.constant 0 : i32
    return %arg0, %arg2 : i32, i32
  }
  func.func @transform_1(%arg0: i32, %arg1: i32, %arg2: i32) -> (i32, i32) {
    %c0_i32 = arith.constant 0 : i32
    return %arg2, %arg1 : i32, i32
  }
  func.func @transform_2(%arg0: i32, %arg1: i32, %arg2: i32) -> (i32, i32) {
    %c0_i32 = arith.constant 0 : i32
    %c0_i32_0 = arith.constant 0 : i32
    return %c0_i32, %arg1 : i32, i32
  }
  func.func @transform_3(%arg0: i32, %arg1: i32, %arg2: i32) -> (i32, i32) {
    %c0_i32 = arith.constant 0 : i32
    return %arg0, %arg1 : i32, i32
  }
}

</mosaic_0001>

<llo_original>
// kernel: tpu_custom_call.1
$region0: #{tpu_custom_call.1}
  #allocation0 [shape = 'u32[]', space=smem, size = 0x4, offset = 0x4, fixed_abs, tag = 'smem constant byte address 0x4 - core index']
  #allocation1 [shape = 'u32[72,128]{1,0:T(1,128)}', space=vmem, size = 0x9000, scoped, tag = 'internal scratch']
  %s0 = inlined_call_operand.hbm [shape: f32[16,128], index: 0, kind: input, shape index: {}]
  %s1 = inlined_call_operand.hbm [shape: f32[128,128], index: 1, kind: input, shape index: {}]
  %s2 = inlined_call_operand.vmem [shape: f32[1,128], index: 2, kind: input, shape index: {}]
  %s3 = inlined_call_operand.hbm [shape: f32[16,128], index: 3, kind: output, shape index: {}]
  %s4 = sld [smem:[#allocation0]]
  $region34: #{tpu_custom_call.1} parent=0
    _
  %s6 = ssub.s32 1, %s4
  %s7 = scalar_select 0, %s6, %s4
  $region1: #{tpu_custom_call.1} parent=0
    #allocation2 [shape = 'u8[8192]{0}', space=vmem, size = 0x2000, scoped, tag = 'input window, operand 0, single buffered']
    #allocation3 [shape = 's32[1]{0}', space=sflag, size = 0x4, scoped, tag = 'scoped memory for tpu_custom_call.1']
    #allocation4 [shape = 's32[1]{0}', space=sflag, size = 0x4, scoped, tag = 'scoped memory for tpu_custom_call.1']
    #allocation5 [shape = 'u8[65536]{0}', space=vmem, size = 0x10000, scoped, tag = 'input window, operand 1, single buffered']
    #allocation6 [shape = 's32[1]{0}', space=sflag, size = 0x4, scoped, tag = 'scoped memory for tpu_custom_call.1']
    #allocation7 [shape = 'u8[8192]{0}', space=vmem, size = 0x2000, scoped, tag = 'output window, operand 0, single buffered']
    %8 = vsyncpa [#allocation3], 0
    %9 = vsyncpa [#allocation6], 0
    %10 = vsyncpa [#allocation4], 0
    // Predicated region
    $region2: #{tpu_custom_call.1} parent=1 // pred_check
      _
    $region3: #{tpu_custom_call.1} parent=1 // pred_check_branch
      %12 = sbr.rel (0) target = $region5
    $region4: #{tpu_custom_call.1} parent=1 // pred_region
      %14 = vsyncadd [#allocation3], 0
      %s15 = sshll.u32 %s0, 4
      %s16 = int_to_ptr.hbm [resolvable:$true] %s15
      %s17 = sshll.u32 [#allocation2], 4
      %s18 = int_to_ptr.vmem [resolvable:$true] %s17
      %23 = dma.hbm_to_vmem [thread:$0]  %s16, 256, %s18, [#allocation3], 128, 128, 8
    $region5: #{tpu_custom_call.1} parent=1 // pred_fallthru
      _
    // Predicated region
    $region6: #{tpu_custom_call.1} parent=1 // pred_check
      _
    $region7: #{tpu_custom_call.1} parent=1 // pred_check_branch
      %25 = sbr.rel (0) target = $region9
    $region8: #{tpu_custom_call.1} parent=1 // pred_region
      %27 = vsyncadd [#allocation6], 0
      %s28 = sshll.u32 %s1, 4
      %s29 = int_to_ptr.hbm [resolvable:$true] %s28
      %s30 = sshll.u32 [#allocation5], 4
      %s31 = int_to_ptr.vmem [resolvable:$true] %s30
      %36 = dma.hbm_to_vmem [thread:$0]  %s29, 2048, %s31, [#allocation6], 128, 128, 8
    $region9: #{tpu_custom_call.1} parent=1 // pred_fallthru
      _
    // Predicated region
    $region10: #{tpu_custom_call.1} parent=1 // pred_check
      _
    $region11: #{tpu_custom_call.1} parent=1 // pred_check_branch
      %38 = sbr.rel (0) target = $region13
    $region12: #{tpu_custom_call.1} parent=1 // pred_region
      _
    $region13: #{tpu_custom_call.1} parent=1 // pred_fallthru
      _
    // Predicated region
    $region14: #{tpu_custom_call.1} parent=1 // pred_check
      _
    $region15: #{tpu_custom_call.1} parent=1 // pred_check_branch
      %40 = sbr.rel (0) target = $region17
    $region16: #{tpu_custom_call.1} parent=1 // pred_region
      %42 = dma.done [#allocation3], 256
    $region17: #{tpu_custom_call.1} parent=1 // pred_fallthru
      _
    // Predicated region
    $region18: #{tpu_custom_call.1} parent=1 // pred_check
      _
    $region19: #{tpu_custom_call.1} parent=1 // pred_check_branch
      %44 = sbr.rel (0) target = $region21
    $region20: #{tpu_custom_call.1} parent=1 // pred_region
      %46 = dma.done [#allocation6], 2048
    $region21: #{tpu_custom_call.1} parent=1 // pred_fallthru
      _
    %p47 = scmp.eq.s32.totalorder 0, 0
    // Predicated region
    $region22: #{tpu_custom_call.1} parent=1 // pred_check
      %p48 = pneg %p47
    $region23: #{tpu_custom_call.1} parent=1 // pred_check_branch
      %50 = sbr.rel (%p48) target = $region25
    $region24: #{tpu_custom_call.1} parent=1 // pred_region
      %v51 = vld [vmem:[%s2] sm:$0x1]
      %v53 = vperm.slane %v51, 0
      %55 = vst [vmem:[#allocation7] sm:$0xff] %v53
      %56 = vst [vmem:[#allocation7 + $0x8] sm:$0xff] %v53
    $region25: #{tpu_custom_call.1} parent=1 // pred_fallthru
      _
    %v57 = vld [vmem:[#allocation7] sm:$0xff]
    %v58 = vld [vmem:[#allocation7 + $0x8] sm:$0xff]
    %v59 = vld [vmem:[#allocation2] sm:$0xff]
    %v60 = vld [vmem:[#allocation2 + $0x8] sm:$0xff]
    %v61 = vld [vmem:[#allocation5] sm:$0xff]
    %v62 = vld [vmem:[#allocation5 + $0x8] sm:$0xff]
    %v63 = vld [vmem:[#allocation5 + $0x10] sm:$0xff]
    %v64 = vld [vmem:[#allocation5 + $0x18] sm:$0xff]
    %v65 = vld [vmem:[#allocation5 + $0x20] sm:$0xff]
    %v66 = vld [vmem:[#allocation5 + $0x28] sm:$0xff]
    %v67 = vld [vmem:[#allocation5 + $0x30] sm:$0xff]
    %v68 = vld [vmem:[#allocation5 + $0x38] sm:$0xff]
    %v69 = vld [vmem:[#allocation5 + $0x40] sm:$0xff]
    %v70 = vld [vmem:[#allocation5 + $0x48] sm:$0xff]
    %v71 = vld [vmem:[#allocation5 + $0x50] sm:$0xff]
    %v72 = vld [vmem:[#allocation5 + $0x58] sm:$0xff]
    %v73 = vld [vmem:[#allocation5 + $0x60] sm:$0xff]
    %v74 = vld [vmem:[#allocation5 + $0x68] sm:$0xff]
    %v75 = vld [vmem:[#allocation5 + $0x70] sm:$0xff]
    %v76 = vld [vmem:[#allocation5 + $0x78] sm:$0xff]
    %77 = vmatpush.msra.mxu0 %v76
    %78 = vmatpush.msra.mxu0 %v75
    %79 = vmatpush.msra.mxu0 %v74
    %80 = vmatpush.msra.mxu0 %v73
    %81 = vmatpush.msra.mxu0 %v72
    %82 = vmatpush.msra.mxu0 %v71
    %83 = vmatpush.msra.mxu0 %v70
    %84 = vmatpush.msra.mxu0 %v69
    %85 = vmatpush.msra.mxu0 %v68
    %86 = vmatpush.msra.mxu0 %v67
    %87 = vmatpush.msra.mxu0 %v66
    %88 = vmatpush.msra.mxu0 %v65
    %89 = vmatpush.msra.mxu0 %v64
    %90 = vmatpush.msra.mxu0 %v63
    %91 = vmatpush.msra.mxu0 %v62
    %92 = vmatpush.msra.mxu0 %v61
    %93 = vmatmul.f32.gmra.mxu0 %v59
    %v94 = vpop.f32.mrf.mxu0
    %v95 = vadd.f32 0.0, %v94
    %96 = vmatmul.f32.gmra.mxu0 %v60
    %v97 = vpop.f32.mrf.mxu0
    %v98 = vadd.f32 0.0, %v97
    %99 = vdwg.mxu0
    %v100 = vadd.f32 %v57, %v95
    %v101 = vadd.f32 %v58, %v98
    %102 = vst [vmem:[#allocation7] sm:$0xff] %v100
    %103 = vst [vmem:[#allocation7 + $0x8] sm:$0xff] %v101
    // Predicated region
    $region26: #{tpu_custom_call.1} parent=1 // pred_check
      _
    $region27: #{tpu_custom_call.1} parent=1 // pred_check_branch
      %105 = sbr.rel (0) target = $region29
    $region28: #{tpu_custom_call.1} parent=1 // pred_region
      %107 = vsyncadd [#allocation4], 0
      %s108 = sshll.u32 [#allocation7], 4
      %s109 = int_to_ptr.vmem [resolvable:$true] %s108
      %s110 = sshll.u32 %s3, 4
      %s111 = int_to_ptr.hbm [resolvable:$true] %s110
      %116 = dma.vmem_to_hbm [thread:$0]  %s109, 256, %s111, [#allocation4], 128, 128, 8
    $region29: #{tpu_custom_call.1} parent=1 // pred_fallthru
      _
    // Predicated region
    $region30: #{tpu_custom_call.1} parent=1 // pred_check
      _
    $region31: #{tpu_custom_call.1} parent=1 // pred_check_branch
      %118 = sbr.rel (0) target = $region33
    $region32: #{tpu_custom_call.1} parent=1 // pred_region
      %120 = dma.done [#allocation4], 256
    $region33: #{tpu_custom_call.1} parent=1 // pred_fallthru
      _
    %121 = vsyncpa [#allocation3], 1
    %122 = vsyncpa [#allocation6], 1
    %123 = vsyncpa [#allocation4], 1

</llo_original>
